<compile_context>
chip_gen: v6e
topology: v6e:2x2x1
jax: 0.10.0
libtpu: 0.0.40
codegen_flags: <defaults>
</compile_context>

<pallas_src>
import functools

import numpy as np
import jax
import jax.numpy as jnp
from jax.experimental import pallas as pl
from jax.experimental.pallas import tpu as pltpu

_EPS = 1e-5
_KBUCKET = 256                 # channel bucket for dense-layer inputs (bounds compiles)

GROWTH = 32
BN_SIZE = 4
BOTTLE = BN_SIZE * GROWTH      # 128
BLOCK_CONFIG = (6, 12, 48, 32)  # DenseNet-201
NUM_INIT = 64


# ----------------------------- generation-aware budgets -----------------------------

def _tpu_vmem_bytes():
    try:
        info = pltpu.get_tpu_info()
        for attr in ("vmem_capacity_bytes", "vmem_bytes", "vmem_size_bytes"):
            v = getattr(info, attr, None)
            if v:
                return int(v)
    except Exception:
        pass
    return 64 * 1024 * 1024    # conservative default (safe on v7x's 64 MiB)


_VMEM_CAP = _tpu_vmem_bytes()
# ~38 MiB scoped on v7x (64 MiB phys), ~76 MiB on v5e/v6e (128 MiB phys).
_VMEM_LIMIT = int(min(0.6 * _VMEM_CAP, 96 * 1024 * 1024))
# Bigger M tiles where VMEM allows it (v5e/v6e), smaller on v7x / unknown.
_TM_CAP = 1024 if _VMEM_CAP >= (100 << 20) else 512


def _mosaic(sem):
    return pltpu.CompilerParams(dimension_semantics=sem, vmem_limit_bytes=_VMEM_LIMIT)


def _choose_tm(M):
    """Largest practical M tile.  Prefers exact tiling; falls back to a partial tail
    block (output stores are masked by Pallas; the stats kernel masks its reads)."""
    if M <= _TM_CAP:
        return M
    for t in (_TM_CAP, 768, 512, 384, 256):
        if t <= _TM_CAP and M % t == 0:
            return t
    return _TM_CAP


def _bucket(c, c_max):
    return min(((c + _KBUCKET - 1) // _KBUCKET) * _KBUCKET, c_max)


# ----------------------------- Pallas kernels -----------------------------

def _matmul_kernel(a_ref, b_ref, o_ref):
    o_ref[...] = jnp.dot(a_ref[...], b_ref[...],
                         preferred_element_type=jnp.float32).astype(o_ref.dtype)


def _bn_stats_kernel(x_ref, s_ref, q_ref, *, tm, m_total):
    i = pl.program_id(0)

    @pl.when(i == 0)
    def _():
        s_ref[...] = jnp.zeros_like(s_ref)
        q_ref[...] = jnp.zeros_like(q_ref)

    x = x_ref[...].astype(jnp.float32)
    if m_total % tm:   # mask rows of a partial tail block (static check)
        rows = jax.lax.broadcasted_iota(jnp.int32, x.shape, 0) + i * tm
        x = jnp.where(rows < m_total, x, 0.0)
    s_ref[...] += jnp.sum(x, axis=0, keepdims=True)
    q_ref[...] += jnp.sum(x * x, axis=0, keepdims=True)


def _bn_scale_shift(s, q, g, b, m_total):
    mean = s * (1.0 / m_total)
    var = jnp.maximum(q * (1.0 / m_total) - mean * mean, 0.0)   # biased var (PyTorch BN fwd)
    scale = g * jax.lax.rsqrt(var + _EPS)
    shift = b - mean * scale
    return scale, shift


def _bn_apply_kernel(x_ref, s_ref, q_ref, g_ref, b_ref, o_ref, *, m_total, relu):
    scale, shift = _bn_scale_shift(s_ref[...], q_ref[...], g_ref[...], b_ref[...], m_total)
    y = x_ref[...].astype(jnp.float32) * scale + shift
    if relu:
        y = jnp.maximum(y, 0.0)
    o_ref[...] = y.astype(o_ref.dtype)


def _bn_matmul_kernel(x_ref, s_ref, q_ref, g_ref, b_ref, w_ref, o_ref, *, m_total, relu):
    # BN (train mode) + ReLU fused into the 1x1-conv MXU matmul.
    scale, shift = _bn_scale_shift(s_ref[...], q_ref[...], g_ref[...], b_ref[...], m_total)
    a = x_ref[...].astype(jnp.float32) * scale + shift
    if relu:
        a = jnp.maximum(a, 0.0)
    o_ref[...] = jnp.dot(a.astype(jnp.bfloat16), w_ref[...],
                         preferred_element_type=jnp.float32).astype(o_ref.dtype)


def _pool_kernel(x_ref, o_ref, *, op, kk):
    if op == "max":
        acc = x_ref[0]
        for k in range(1, kk):
            acc = jnp.maximum(acc, x_ref[k])
        o_ref[...] = acc.astype(o_ref.dtype)
    else:
        acc = x_ref[0].astype(jnp.float32)
        for k in range(1, kk):
            acc = acc + x_ref[k].astype(jnp.float32)
        o_ref[...] = (acc * (1.0 / kk)).astype(o_ref.dtype)


# ----------------------------- pallas_call wrappers -----------------------------

@functools.partial(jax.jit, static_argnames=("cw", "tm"))
def pallas_bn_stats(x, *, cw, tm):
    """Per-channel sum / sum-of-squares over all rows of x[:, :cw]."""
    M = x.shape[0]
    return pl.pallas_call(
        functools.partial(_bn_stats_kernel, tm=tm, m_total=M),
        out_shape=(jax.ShapeDtypeStruct((1, cw), jnp.float32),
                   jax.ShapeDtypeStruct((1, cw), jnp.float32)),
        grid=(pl.cdiv(M, tm),),
        in_specs=[pl.BlockSpec((tm, cw), lambda i: (i, 0))],
        out_specs=(pl.BlockSpec((1, cw), lambda i: (0, 0)),
                   pl.BlockSpec((1, cw), lambda i: (0, 0))),
        compiler_params=_mosaic(("arbitrary",)),
    )(x)


@functools.partial(jax.jit, static_argnames=("cw", "tm", "relu", "out_dtype"))
def pallas_bn_apply(x, s, q, g, b, *, cw, tm, relu, out_dtype):
    """Training-mode BN (+ optional ReLU) applied elementwise, tiled over M."""
    M = x.shape[0]
    vec = pl.BlockSpec((1, cw), lambda i: (0, 0))
    return pl.pallas_call(
        functools.partial(_bn_apply_kernel, m_total=float(M), relu=relu),
        out_shape=jax.ShapeDtypeStruct((M, cw), out_dtype),
        grid=(pl.cdiv(M, tm),),
        in_specs=[pl.BlockSpec((tm, cw), lambda i: (i, 0)), vec, vec, vec, vec],
        out_specs=pl.BlockSpec((tm, cw), lambda i: (i, 0)),
        compiler_params=_mosaic(("parallel",)),
    )(x, s, q, g, b)


@functools.partial(jax.jit, static_argnames=("cw", "tm", "relu", "out_dtype"))
def pallas_bn_matmul(x, s, q, g, b, w, *, cw, tm, relu, out_dtype):
    """BN(train) -> ReLU -> 1x1 conv (matmul), reading only x[:, :cw], tiled over M."""
    M = x.shape[0]
    nc = w.shape[1]
    vec = pl.BlockSpec((1, cw), lambda i: (0, 0))
    return pl.pallas_call(
        functools.partial(_bn_matmul_kernel, m_total=float(M), relu=relu),
        out_shape=jax.ShapeDtypeStruct((M, nc), out_dtype),
        grid=(pl.cdiv(M, tm),),
        in_specs=[pl.BlockSpec((tm, cw), lambda i: (i, 0)), vec, vec, vec, vec,
                  pl.BlockSpec((cw, nc), lambda i: (0, 0))],
        out_specs=pl.BlockSpec((tm, nc), lambda i: (i, 0)),
        compiler_params=_mosaic(("parallel",)),
    )(x, s, q, g, b, w)


@functools.partial(jax.jit, static_argnames=("tm", "out_dtype"))
def _pallas_matmul(a, b, *, tm, out_dtype):
    M, K = a.shape
    N = b.shape[1]
    return pl.pallas_call(
        _matmul_kernel,
        out_shape=jax.ShapeDtypeStruct((M, N), out_dtype),
        grid=(pl.cdiv(M, tm),),
        in_specs=[pl.BlockSpec((tm, K), lambda i: (i, 0)),
                  pl.BlockSpec((K, N), lambda i: (0, 0))],
        out_specs=pl.BlockSpec((tm, N), lambda i: (i, 0)),
        compiler_params=_mosaic(("parallel",)),
    )(a, b)


def pallas_matmul(a, b, out_dtype=jnp.bfloat16):
    return _pallas_matmul(a, b, tm=_choose_tm(a.shape[0]), out_dtype=out_dtype)


@functools.partial(jax.jit, static_argnames=("op", "tm", "out_dtype"))
def _pallas_pool(stk, *, op, tm, out_dtype):
    KK, M, C = stk.shape
    return pl.pallas_call(
        functools.partial(_pool_kernel, op=op, kk=KK),
        out_shape=jax.ShapeDtypeStruct((M, C), out_dtype),
        grid=(pl.cdiv(M, tm),),
        in_specs=[pl.BlockSpec((KK, tm, C), lambda i: (0, i, 0))],
        out_specs=pl.BlockSpec((tm, C), lambda i: (i, 0)),
        compiler_params=_mosaic(("parallel",)),
    )(stk)


def pallas_pool(stk, op):
    return _pallas_pool(stk, op=op, tm=_choose_tm(stk.shape[1]), out_dtype=stk.dtype)


@functools.partial(jax.jit, donate_argnums=(0,))
def _write_columns(buf, new, col):
    """In-place (donated) append of `new` into columns [col, col+new.shape[1]) of buf."""
    col = jnp.asarray(col, jnp.int32)
    return jax.lax.dynamic_update_slice(buf, new, (jnp.zeros((), jnp.int32), col))


# ----------------------------- XLA glue (im2col, pooling windows) -----------------------------

def _im2col(x, kh, kw, stride, pad):
    # TODO(synk): im2col still materializes kh*kw shifted copies; a BlockSpec-indexed
    # K-grid over the taps (shifted-window index_map + VMEM accumulator) would remove it.
    N, H, W, C = x.shape
    xp = jnp.pad(x, ((0, 0), (pad, pad), (pad, pad), (0, 0)))
    Ho = (H + 2 * pad - kh) // stride + 1
    Wo = (W + 2 * pad - kw) // stride + 1
    cols = [xp[:, i:i + stride * Ho:stride, j:j + stride * Wo:stride, :]
            for i in range(kh) for j in range(kw)]
    patches = jnp.stack(cols, axis=3)                     # (N, Ho, Wo, kh*kw, C)
    return patches.reshape(N * Ho * Wo, kh * kw * C), (N, Ho, Wo)


@functools.partial(jax.jit, static_argnames=("nhw",))
def conv3x3_32(h2d, w, *, nhw):
    """3x3 / s1 / p1 conv of the (already BN+ReLU'd) bottleneck -> 32 new channels.
    Weight columns are zero-padded to 128 so the kernel's output stores are lane-dense."""
    N, H, W = nhw
    a, _ = _im2col(h2d.reshape(N, H, W, BOTTLE), 3, 3, 1, 1)
    out = pallas_matmul(a, w)                              # (M, 128) lane-dense
    return out[:, :GROWTH]


def maxpool_3x3_s2_p1(x):
    N, H, W, C = x.shape
    xp = jnp.pad(x, ((0, 0), (1, 1), (1, 1), (0, 0)), constant_values=-jnp.inf)
    Ho = (H - 1) // 2 + 1
    Wo = (W - 1) // 2 + 1
    wins = [xp[:, i:i + 2 * Ho:2, j:j + 2 * Wo:2, :] for i in range(3) for j in range(3)]
    stk = jnp.stack(wins, axis=0).reshape(9, N * Ho * Wo, C)
    return pallas_pool(stk, "max").reshape(N, Ho, Wo, C)


def avgpool_2x2_s2(x):
    N, H, W, C = x.shape
    Ho, Wo = H // 2, W // 2
    wins = [x[:, i:2 * Ho:2, j:2 * Wo:2, :] for i in range(2) for j in range(2)]
    stk = jnp.stack(wins, axis=0).reshape(4, N * Ho * Wo, C)
    return pallas_pool(stk, "mean").reshape(N, Ho, Wo, C)


# ----------------------------- parameters -----------------------------

def init_params(seed=0):
    """Random weights in native PyTorch layouts (pretrained weights unavailable here)."""
    rng = np.random.default_rng(seed)

    def conv_w(cout, cin, k):
        return (0.05 * rng.standard_normal((cout, cin, k, k))).astype(np.float32)

    def bn_p(c):
        return ((1.0 + 0.1 * rng.standard_normal(c)).astype(np.float32),
                (0.1 * rng.standard_normal(c)).astype(np.float32))

    params = {"conv0": conv_w(NUM_INIT, 3, 7), "norm0": bn_p(NUM_INIT),
              "blocks": [], "transitions": []}
    c = NUM_INIT
    for bi, nlayers in enumerate(BLOCK_CONFIG):
        layers = []
        for l in range(nlayers):
            cin = c + l * GROWTH
            layers.append(dict(g1b1=bn_p(cin), w1=conv_w(BOTTLE, cin, 1),
                               g2b2=bn_p(BOTTLE), w2=conv_w(GROWTH, BOTTLE, 3)))
        params["blocks"].append(layers)
        c += nlayers * GROWTH
        if bi != len(BLOCK_CONFIG) - 1:
            params["transitions"].append(dict(gb=bn_p(c), w=conv_w(c // 2, c, 1)))
            c //= 2
    params["norm5"] = bn_p(c)
    params["enc_dim"] = c          # 1920 == net.classifier.in_features
    return params


def _prep_vec(v, cw):
    v = np.asarray(v, np.float32)
    return jnp.asarray(np.pad(v, (0, cw - v.shape[0])).reshape(1, cw))


def _prep_w1x1(w, cw):            # (Cout, Cin, 1, 1) -> (cw, Cout) bf16, zero-padded rows
    cout, cin = w.shape[:2]
    wm = np.asarray(w, np.float32).reshape(cout, cin).T
    wm = np.pad(wm, ((0, cw - cin), (0, 0)))
    return jnp.asarray(wm, jnp.bfloat16)


def _prep_wkxk(w, cout_pad=None):  # (Cout, Cin, kh, kw) -> (kh*kw*Cin, Cout[pad]) bf16
    cout, cin, kh, kw = w.shape
    wm = np.transpose(np.asarray(w, np.float32), (2, 3, 1, 0)).reshape(kh * kw * cin, cout)
    if cout_pad and cout_pad > cout:
        wm = np.pad(wm, ((0, 0), (0, cout_pad - cout)))
    return jnp.asarray(wm, jnp.bfloat16)


def prepare_params(params):
    """Convert PyTorch-layout params into kernel-ready (padded, transposed, bf16) form."""
    kp = {"conv0_w": _prep_wkxk(params["conv0"]),
          "norm0_g": _prep_vec(params["norm0"][0], NUM_INIT),
          "norm0_b": _prep_vec(params["norm0"][1], NUM_INIT),
          "blocks": [], "transitions": [],
          "norm5_g": _prep_vec(params["norm5"][0], params["enc_dim"]),
          "norm5_b": _prep_vec(params["norm5"][1], params["enc_dim"]),
          "enc_dim": params["enc_dim"]}
    c = NUM_INIT
    for bi, layers in enumerate(params["blocks"]):
        c_final = c + GROWTH * len(layers)
        plist = []
        for l, p in enumerate(layers):
            cin = c + l * GROWTH
            cb = _bucket(cin, c_final)
            g1, b1 = p["g1b1"]
            g2, b2 = p["g2b2"]
            plist.append(dict(
                cb=cb,
                g1=_prep_vec(g1, cb), b1=_prep_vec(b1, cb), w1=_prep_w1x1(p["w1"], cb),
                g2=_prep_vec(g2, BOTTLE), b2=_prep_vec(b2, BOTTLE),
                w2=_prep_wkxk(p["w2"], cout_pad=BOTTLE)))
        kp["blocks"].append(plist)
        c = c_final
        if bi != len(BLOCK_CONFIG) - 1:
            gt, bt = params["transitions"][bi]["gb"]
            kp["transitions"].append(dict(
                g=_prep_vec(gt, c), b=_prep_vec(bt, c),
                w=_prep_w1x1(params["transitions"][bi]["w"], c)))
            c //= 2
    return kp


# ----------------------------- DenseNet-201 forward -----------------------------

def dense_block(base2d, nhw, layers):
    M, c = base2d.shape
    c_final = c + GROWTH * len(layers)
    tm = _choose_tm(M)
    # Single pre-allocated, lane-aligned feature buffer: replaces per-layer concat+pad.
    buf = jnp.pad(base2d.astype(jnp.bfloat16), ((0, 0), (0, c_final - c)))
    for p in layers:
        cb = p["cb"]
        # norm1 + relu1 + conv1 (1x1): stats kernel + BN fused into the MXU matmul.
        s1, q1 = pallas_bn_stats(buf, cw=cb, tm=tm)
        bott = pallas_bn_matmul(buf, s1, q1, p["g1"], p["b1"], p["w1"],
                                cw=cb, tm=tm, relu=True, out_dtype=jnp.bfloat16)
        # norm2 + relu2 (standalone: conv2's spatial zero padding must see post-ReLU zeros).
        s2, q2 = pallas_bn_stats(bott, cw=BOTTLE, tm=tm)
        h = pallas_bn_apply(bott, s2, q2, p["g2"], p["b2"],
                            cw=BOTTLE, tm=tm, relu=True, out_dtype=jnp.bfloat16)
        # conv2 (3x3) -> append 32 new channels in place (donated buffer).
        new = conv3x3_32(h, p["w2"], nhw=nhw)
        buf = _write_columns(buf, new, c)
        c += GROWTH
    return buf


def transition(x2d, nhw, p):
    M, c = x2d.shape
    tm = _choose_tm(M)
    s, q = pallas_bn_stats(x2d, cw=c, tm=tm)
    h = pallas_bn_matmul(x2d, s, q, p["g"], p["b"], p["w"],
                         cw=c, tm=tm, relu=True, out_dtype=jnp.bfloat16)
    N, H, W = nhw
    pooled = avgpool_2x2_s2(h.reshape(N, H, W, c // 2))
    No, Ho, Wo, _ = pooled.shape
    return pooled.reshape(No * Ho * Wo, c // 2), (No, Ho, Wo)


def densenet201_features(x_nchw, kp):
    x = jnp.transpose(x_nchw.astype(jnp.float32), (0, 2, 3, 1)).astype(jnp.bfloat16)
    # conv0 (7x7 / s2 / p3)
    a, (N, H, W) = _im2col(x, 7, 7, 2, 3)
    y = pallas_matmul(a, kp["conv0_w"])                                 # (M, 64) bf16
    # norm0 + relu0
    tm = _choose_tm(y.shape[0])
    s, q = pallas_bn_stats(y, cw=NUM_INIT, tm=tm)
    y = pallas_bn_apply(y, s, q, kp["norm0_g"], kp["norm0_b"],
                        cw=NUM_INIT, tm=tm, relu=True, out_dtype=jnp.bfloat16)
    # pool0 (3x3 max / s2 / p1)
    x = maxpool_3x3_s2_p1(y.reshape(N, H, W, NUM_INIT))
    N, H, W, C = x.shape
    nhw = (N, H, W)
    x2d = x.reshape(N * H * W, C)
    # dense blocks + transitions
    for bi, layers in enumerate(kp["blocks"]):
        x2d = dense_block(x2d, nhw, layers)
        if bi < len(kp["transitions"]):
            x2d, nhw = transition(x2d, nhw, kp["transitions"][bi])
    # norm5 (no trailing ReLU)
    tm = _choose_tm(x2d.shape[0])
    s, q = pallas_bn_stats(x2d, cw=kp["enc_dim"], tm=tm)
    out = pallas_bn_apply(x2d, s, q, kp["norm5_g"], kp["norm5_b"],
                          cw=kp["enc_dim"], tm=tm, relu=False, out_dtype=jnp.float32)
    N, H, W = nhw
    out = out.reshape(N, H, W, kp["enc_dim"])
    return jnp.transpose(out, (0, 3, 1, 2))                              # back to NCHW


if __name__ == "__main__":
    kp = prepare_params(init_params(0))
    key = jax.random.PRNGKey(0)
    x = jax.random.normal(key, (2, 3, 32, 32), dtype=jnp.float32)        # NCHW, like PyTorch
    feats = jax.block_until_ready(densenet201_features(x, kp))
    assert feats.shape == (2, kp["enc_dim"], 1, 1), feats.shape          # enc_dim = 1920
    assert feats.dtype == jnp.float32, feats.dtype
    assert bool(jnp.all(jnp.isfinite(feats))), "non-finite output"
    print("KERNEL_OK")
</pallas_src>

<mosaic_0001>
module attributes {stable_mosaic.version = 11 : i64} {
  func.func @_matmul_kernel(%arg0: i32, %arg1: memref<512x147xbf16, #tpu.memory_space<vmem>>, %arg2: memref<147x64xbf16, #tpu.memory_space<vmem>>, %arg3: memref<512x64xbf16, #tpu.memory_space<vmem>>) attributes {dimension_semantics = [#tpu.dimension_semantics<parallel>], iteration_bounds = array<i64: 1>, scalar_prefetch = 0 : i64, scratch_operands = 0 : i64, tpu.core_type = #tpu.core_type<tc>, window_params = [{transform_indices = @transform_0, window_bounds = array<i64: 512, 147>}, {pipeline_mode = #tpu.pipeline_mode<synchronous>, transform_indices = @transform_1, window_bounds = array<i64: 147, 64>}, {transform_indices = @transform_2, window_bounds = array<i64: 512, 64>}]} {
    %c0 = arith.constant 0 : index
    %c0_0 = arith.constant 0 : index
    %0 = vector.load %arg1[%c0, %c0_0] : memref<512x147xbf16, #tpu.memory_space<vmem>>, vector<512x147xbf16>
    %c0_1 = arith.constant 0 : index
    %c0_2 = arith.constant 0 : index
    %1 = vector.load %arg2[%c0_1, %c0_2] : memref<147x64xbf16, #tpu.memory_space<vmem>>, vector<147x64xbf16>
    %cst = arith.constant dense<0.000000e+00> : vector<512x64xf32>
    %2 = tpu.matmul %0, %1, %cst {dimension_numbers = #tpu.dot_dimension_numbers<[1], [0], [0], [1], [0, 0, 1, 1], [], []>} : vector<512x147xbf16>, vector<147x64xbf16>, vector<512x64xf32> -> vector<512x64xf32>
    %3 = arith.truncf %2 : vector<512x64xf32> to vector<512x64xbf16>
    %c0_3 = arith.constant 0 : index
    %c0_4 = arith.constant 0 : index
    %4 = vector.load %arg3[%c0_3, %c0_4] : memref<512x64xbf16, #tpu.memory_space<vmem>>, vector<512x64xbf16>
    tpu.vector_store %arg3[%c0_3, %c0_4], %3 {strides = array<i32>} : memref<512x64xbf16, #tpu.memory_space<vmem>>, vector<512x64xbf16>,
    return
  }
  func.func @transform_0(%arg0: i32) -> (i32, i32) {
    %c0_i32 = arith.constant 0 : i32
    %c0_i32_0 = arith.constant 0 : i32
    return %arg0, %c0_i32 : i32, i32
  }
  func.func @transform_1(%arg0: i32) -> (i32, i32) {
    %c0_i32 = arith.constant 0 : i32
    %c0_i32_0 = arith.constant 0 : i32
    %c0_i32_1 = arith.constant 0 : i32
    return %c0_i32, %c0_i32_0 : i32, i32
  }
  func.func @transform_2(%arg0: i32) -> (i32, i32) {
    %c0_i32 = arith.constant 0 : i32
    %c0_i32_0 = arith.constant 0 : i32
    return %arg0, %c0_i32 : i32, i32
  }
}

</mosaic_0001>

<llo_original>
// kernel: _pallas_matmul.1
$region0: #{_pallas_matmul.1}
  #allocation0 [shape = 'u32[]', space=smem, size = 0x4, offset = 0x4, fixed_abs, tag = 'smem constant byte address 0x4 - core index']
  #allocation1 [shape = 'u32[144,128]{1,0:T(1,128)}', space=vmem, size = 0x12000, scoped, tag = 'internal scratch']
  %s0 = inlined_call_operand.vmem [shape: bf16[512,147], index: 0, kind: input, shape index: {}]
  %s1 = inlined_call_operand.vmem [shape: bf16[147,64], index: 1, kind: input, shape index: {}]
  %s2 = inlined_call_operand.vmem [shape: bf16[512,64], index: 2, kind: output, shape index: {}]
  %s3 = sld [smem:[#allocation0]]
  $region18: #{_pallas_matmul.1} parent=0
    _
  %s5 = ssub.s32 1, %s3
  %s6 = scalar_select 0, %s5, %s3
  // Predicated region
  $region2: #{_pallas_matmul.1} parent=0 // pred_check
    _
  $region3: #{_pallas_matmul.1} parent=0 // pred_check_branch
    %8 = sbr.rel (0) target = $region5
  $region4: #{_pallas_matmul.1} parent=0 // pred_region
    _
  $region5: #{_pallas_matmul.1} parent=0 // pred_fallthru
    _
  // Predicated region
  $region6: #{_pallas_matmul.1} parent=0 // pred_check
    _
  $region7: #{_pallas_matmul.1} parent=0 // pred_check_branch
    %10 = sbr.rel (0) target = $region9
  $region8: #{_pallas_matmul.1} parent=0 // pred_region
    _
  $region9: #{_pallas_matmul.1} parent=0 // pred_fallthru
    _
  %v12 = vld [vmem:[%s0] sm:$0xff]
  %v13 = vld [vmem:[%s0 + $0x8] sm:$0xff]
  %v14 = vld [vmem:[%s0 + $0x10] sm:$0xff]
  %v15 = vld [vmem:[%s0 + $0x18] sm:$0xff]
  %v16 = vld [vmem:[%s0 + $0x20] sm:$0xff]
  %v17 = vld [vmem:[%s0 + $0x28] sm:$0xff]
  %v18 = vld [vmem:[%s0 + $0x30] sm:$0xff]
  %v19 = vld [vmem:[%s0 + $0x38] sm:$0xff]
  %v20 = vld [vmem:[%s0 + $0x40] sm:$0xff]
  %v21 = vld [vmem:[%s0 + $0x48] sm:$0xff]
  %v22 = vld [vmem:[%s0 + $0x50] sm:$0xff]
  %v23 = vld [vmem:[%s0 + $0x58] sm:$0xff]
  %v24 = vld [vmem:[%s0 + $0x60] sm:$0xff]
  %v25 = vld [vmem:[%s0 + $0x68] sm:$0xff]
  %v26 = vld [vmem:[%s0 + $0x70] sm:$0xff]
  %v27 = vld [vmem:[%s0 + $0x78] sm:$0xff]
  %v28 = vld [vmem:[%s0 + $0x80] sm:$0xff]
  %v29 = vld [vmem:[%s0 + $0x88] sm:$0xff]
  %v30 = vld [vmem:[%s0 + $0x90] sm:$0xff]
  %v31 = vld [vmem:[%s0 + $0x98] sm:$0xff]
  %v32 = vld [vmem:[%s0 + $0xa0] sm:$0xff]
  %v33 = vld [vmem:[%s0 + $0xa8] sm:$0xff]
  %v34 = vld [vmem:[%s0 + $0xb0] sm:$0xff]
  %v35 = vld [vmem:[%s0 + $0xb8] sm:$0xff]
  %v36 = vld [vmem:[%s0 + $0xc0] sm:$0xff]
  %v37 = vld [vmem:[%s0 + $0xc8] sm:$0xff]
  %v38 = vld [vmem:[%s0 + $0xd0] sm:$0xff]
  %v39 = vld [vmem:[%s0 + $0xd8] sm:$0xff]
  %v40 = vld [vmem:[%s0 + $0xe0] sm:$0xff]
  %v41 = vld [vmem:[%s0 + $0xe8] sm:$0xff]
  %v42 = vld [vmem:[%s0 + $0xf0] sm:$0xff]
  %v43 = vld [vmem:[%s0 + $0xf8] sm:$0xff]
  %v44 = vld [vmem:[%s0 + $0x100] sm:$0xff]
  %v45 = vld [vmem:[%s0 + $0x108] sm:$0xff]
  %v46 = vld [vmem:[%s0 + $0x110] sm:$0xff]
  %v47 = vld [vmem:[%s0 + $0x118] sm:$0xff]
  %v48 = vld [vmem:[%s0 + $0x120] sm:$0xff]
  %v49 = vld [vmem:[%s0 + $0x128] sm:$0xff]
  %v50 = vld [vmem:[%s0 + $0x130] sm:$0xff]
  %v51 = vld [vmem:[%s0 + $0x138] sm:$0xff]
  %v52 = vld [vmem:[%s0 + $0x140] sm:$0xff]
  %v53 = vld [vmem:[%s0 + $0x148] sm:$0xff]
  %v54 = vld [vmem:[%s0 + $0x150] sm:$0xff]
  %v55 = vld [vmem:[%s0 + $0x158] sm:$0xff]
  %v56 = vld [vmem:[%s0 + $0x160] sm:$0xff]
  %v57 = vld [vmem:[%s0 + $0x168] sm:$0xff]
  %v58 = vld [vmem:[%s0 + $0x170] sm:$0xff]
  %v59 = vld [vmem:[%s0 + $0x178] sm:$0xff]
  %v60 = vld [vmem:[%s0 + $0x180] sm:$0xff]
  %v61 = vld [vmem:[%s0 + $0x188] sm:$0xff]
  %v62 = vld [vmem:[%s0 + $0x190] sm:$0xff]
  %v63 = vld [vmem:[%s0 + $0x198] sm:$0xff]
  %v64 = vld [vmem:[%s0 + $0x1a0] sm:$0xff]
  %v65 = vld [vmem:[%s0 + $0x1a8] sm:$0xff]
  %v66 = vld [vmem:[%s0 + $0x1b0] sm:$0xff]
  %v67 = vld [vmem:[%s0 + $0x1b8] sm:$0xff]
  %v68 = vld [vmem:[%s0 + $0x1c0] sm:$0xff]
  %v69 = vld [vmem:[%s0 + $0x1c8] sm:$0xff]
  %v70 = vld [vmem:[%s0 + $0x1d0] sm:$0xff]
  %v71 = vld [vmem:[%s0 + $0x1d8] sm:$0xff]
  %v72 = vld [vmem:[%s0 + $0x1e0] sm:$0xff]
  %v73 = vld [vmem:[%s0 + $0x1e8] sm:$0xff]
  %v74 = vld [vmem:[%s0 + $0x1f0] sm:$0xff]
  %v75 = vld [vmem:[%s0 + $0x1f8] sm:$0xff]
  %v76 = vld [vmem:[%s1] sm:$0xf]
  %v77 = vld [vmem:[%s1 + $0x4] sm:$0xf]
  %v78 = vld [vmem:[%s1 + $0x8] sm:$0xf]
  %v79 = vld [vmem:[%s1 + $0xc] sm:$0xf]
  %v80 = vld [vmem:[%s1 + $0x10] sm:$0xf]
  %v81 = vld [vmem:[%s1 + $0x14] sm:$0xf]
  %v82 = vld [vmem:[%s1 + $0x18] sm:$0xf]
  %v83 = vld [vmem:[%s1 + $0x1c] sm:$0xf]
  %v84 = vld [vmem:[%s1 + $0x20] sm:$0xf]
  %v85 = vld [vmem:[%s1 + $0x24] sm:$0xf]
  %v86 = vld [vmem:[%s1 + $0x28] sm:$0xf]
  %v87 = vld [vmem:[%s1 + $0x2c] sm:$0xf]
  %v88 = vld [vmem:[%s1 + $0x30] sm:$0xf]
  %v89 = vld [vmem:[%s1 + $0x34] sm:$0xf]
  %v90 = vld [vmem:[%s1 + $0x38] sm:$0xf]
  %v91 = vld [vmem:[%s1 + $0x3c] sm:$0xf]
  %v92 = vld [vmem:[%s1 + $0x40] sm:$0xf]
  %v93 = vld [vmem:[%s1 + $0x44] sm:$0xf]
  %v94 = vld [vmem:[%s1 + $0x48] sm:$0x3]
  %v159 = vunpack.c.l.b16 %v12
  %v160 = vunpack.c.h.b16 %v12
  %v161 = vunpack.c.l.b16 %v13
  %v162 = vunpack.c.h.b16 %v13
  %v163 = vunpack.c.l.b16 %v14
  %v164 = vunpack.c.h.b16 %v14
  %v165 = vunpack.c.l.b16 %v15
  %v166 = vunpack.c.h.b16 %v15
  %v167 = vunpack.c.l.b16 %v16
  %v168 = vunpack.c.h.b16 %v16
  %v169 = vunpack.c.l.b16 %v17
  %v170 = vunpack.c.h.b16 %v17
  %v171 = vunpack.c.l.b16 %v18
  %v172 = vunpack.c.h.b16 %v18
  %v173 = vunpack.c.l.b16 %v19
  %v174 = vunpack.c.h.b16 %v19
  %v175 = vunpack.c.l.b16 %v20
  %v176 = vunpack.c.h.b16 %v20
  %v177 = vunpack.c.l.b16 %v21
  %v178 = vunpack.c.h.b16 %v21
  %v179 = vunpack.c.l.b16 %v22
  %v180 = vunpack.c.h.b16 %v22
  %v181 = vunpack.c.l.b16 %v23
  %v182 = vunpack.c.h.b16 %v23
  %v183 = vunpack.c.l.b16 %v24
  %v184 = vunpack.c.h.b16 %v24
  %v185 = vunpack.c.l.b16 %v25
  %v186 = vunpack.c.h.b16 %v25
  %v187 = vunpack.c.l.b16 %v26
  %v188 = vunpack.c.h.b16 %v26
  %v189 = vunpack.c.l.b16 %v27
  %v190 = vunpack.c.h.b16 %v27
  %v191 = vunpack.c.l.b16 %v28
  %v192 = vunpack.c.h.b16 %v28
  %v193 = vunpack.c.l.b16 %v29
  %v194 = vunpack.c.h.b16 %v29
  %v195 = vunpack.c.l.b16 %v30
  %v196 = vunpack.c.h.b16 %v30
  %v197 = vunpack.c.l.b16 %v31
  %v198 = vunpack.c.h.b16 %v31
  %v199 = vunpack.c.l.b16 %v32
  %v200 = vunpack.c.h.b16 %v32
  %v201 = vunpack.c.l.b16 %v33
  %v202 = vunpack.c.h.b16 %v33
  %v203 = vunpack.c.l.b16 %v34
  %v204 = vunpack.c.h.b16 %v34
  %v205 = vunpack.c.l.b16 %v35
  %v206 = vunpack.c.h.b16 %v35
  %v207 = vunpack.c.l.b16 %v36
  %v208 = vunpack.c.h.b16 %v36
  %v209 = vunpack.c.l.b16 %v37
  %v210 = vunpack.c.h.b16 %v37
  %v211 = vunpack.c.l.b16 %v38
  %v212 = vunpack.c.h.b16 %v38
  %v213 = vunpack.c.l.b16 %v39
  %v214 = vunpack.c.h.b16 %v39
  %v215 = vunpack.c.l.b16 %v40
  %v216 = vunpack.c.h.b16 %v40
  %v217 = vunpack.c.l.b16 %v41
  %v218 = vunpack.c.h.b16 %v41
  %v219 = vunpack.c.l.b16 %v42
  %v220 = vunpack.c.h.b16 %v42
  %v221 = vunpack.c.l.b16 %v43
  %v222 = vunpack.c.h.b16 %v43
  %v223 = vunpack.c.l.b16 %v44
  %v224 = vunpack.c.h.b16 %v44
  %v225 = vunpack.c.l.b16 %v45
  %v226 = vunpack.c.h.b16 %v45
  %v227 = vunpack.c.l.b16 %v46
  %v228 = vunpack.c.h.b16 %v46
  %v229 = vunpack.c.l.b16 %v47
  %v230 = vunpack.c.h.b16 %v47
  %v231 = vunpack.c.l.b16 %v48
  %v232 = vunpack.c.h.b16 %v48
  %v233 = vunpack.c.l.b16 %v49
  %v234 = vunpack.c.h.b16 %v49
  %v235 = vunpack.c.l.b16 %v50
  %v236 = vunpack.c.h.b16 %v50
  %v237 = vunpack.c.l.b16 %v51
  %v238 = vunpack.c.h.b16 %v51
  %v239 = vunpack.c.l.b16 %v52
  %v240 = vunpack.c.h.b16 %v52
  %v241 = vunpack.c.l.b16 %v53
  %v242 = vunpack.c.h.b16 %v53
  %v243 = vunpack.c.l.b16 %v54
  %v244 = vunpack.c.h.b16 %v54
  %v245 = vunpack.c.l.b16 %v55
  %v246 = vunpack.c.h.b16 %v55
  %v247 = vunpack.c.l.b16 %v56
  %v248 = vunpack.c.h.b16 %v56
  %v249 = vunpack.c.l.b16 %v57
  %v250 = vunpack.c.h.b16 %v57
  %v251 = vunpack.c.l.b16 %v58
  %v252 = vunpack.c.h.b16 %v58
  %v253 = vunpack.c.l.b16 %v59
  %v254 = vunpack.c.h.b16 %v59
  %v255 = vunpack.c.l.b16 %v60
  %v256 = vunpack.c.h.b16 %v60
  %v257 = vunpack.c.l.b16 %v61
  %v258 = vunpack.c.h.b16 %v61
  %v259 = vunpack.c.l.b16 %v62
  %v260 = vunpack.c.h.b16 %v62
  %v261 = vunpack.c.l.b16 %v63
  %v262 = vunpack.c.h.b16 %v63
  %v263 = vunpack.c.l.b16 %v64
  %v264 = vunpack.c.h.b16 %v64
  %v265 = vunpack.c.l.b16 %v65
  %v266 = vunpack.c.h.b16 %v65
  %v267 = vunpack.c.l.b16 %v66
  %v268 = vunpack.c.h.b16 %v66
  %v269 = vunpack.c.l.b16 %v67
  %v270 = vunpack.c.h.b16 %v67
  %v271 = vunpack.c.l.b16 %v68
  %v272 = vunpack.c.h.b16 %v68
  %v273 = vunpack.c.l.b16 %v69
  %v274 = vunpack.c.h.b16 %v69
  %v275 = vunpack.c.l.b16 %v70
  %v276 = vunpack.c.h.b16 %v70
  %v277 = vunpack.c.l.b16 %v71
  %v278 = vunpack.c.h.b16 %v71
  %v279 = vunpack.c.l.b16 %v72
  %v280 = vunpack.c.h.b16 %v72
  %v281 = vunpack.c.l.b16 %v73
  %v282 = vunpack.c.h.b16 %v73
  %v283 = vunpack.c.l.b16 %v74
  %v284 = vunpack.c.h.b16 %v74
  %v285 = vunpack.c.l.b16 %v75
  %v286 = vunpack.c.h.b16 %v75
  %v287 = vpack.c.b16 %v161, %v159
  %v288 = vpack.c.b16 %v162, %v160
  %v289 = vpack.c.b16 %v165, %v163
  %v290 = vpack.c.b16 %v166, %v164
  %v291 = vpack.c.b16 %v169, %v167
  %v292 = vpack.c.b16 %v170, %v168
  %v293 = vpack.c.b16 %v173, %v171
  %v294 = vpack.c.b16 %v174, %v172
  %v295 = vpack.c.b16 %v177, %v175
  %v296 = vpack.c.b16 %v178, %v176
  %v297 = vpack.c.b16 %v181, %v179
  %v298 = vpack.c.b16 %v182, %v180
  %v299 = vpack.c.b16 %v185, %v183
  %v300 = vpack.c.b16 %v186, %v184
  %v301 = vpack.c.b16 %v189, %v187
  %v302 = vpack.c.b16 %v190, %v188
  %v303 = vpack.c.b16 %v193, %v191
  %v304 = vpack.c.b16 %v194, %v192
  %v305 = vpack.c.b16 %v197, %v195
  %v306 = vpack.c.b16 %v198, %v196
  %v307 = vpack.c.b16 %v201, %v199
  %v308 = vpack.c.b16 %v202, %v200
  %v309 = vpack.c.b16 %v205, %v203
  %v310 = vpack.c.b16 %v206, %v204
  %v311 = vpack.c.b16 %v209, %v207
  %v312 = vpack.c.b16 %v210, %v208
  %v313 = vpack.c.b16 %v213, %v211
  %v314 = vpack.c.b16 %v214, %v212
  %v315 = vpack.c.b16 %v217, %v215
  %v316 = vpack.c.b16 %v218, %v216
  %v317 = vpack.c.b16 %v221, %v219
  %v318 = vpack.c.b16 %v222, %v220
  %v319 = vpack.c.b16 %v225, %v223
  %v320 = vpack.c.b16 %v226, %v224
  %v321 = vpack.c.b16 %v229, %v227
  %v322 = vpack.c.b16 %v230, %v228
  %v323 = vpack.c.b16 %v233, %v231
  %v324 = vpack.c.b16 %v234, %v232
  %v325 = vpack.c.b16 %v237, %v235
  %v326 = vpack.c.b16 %v238, %v236
  %v327 = vpack.c.b16 %v241, %v239
  %v328 = vpack.c.b16 %v242, %v240
  %v329 = vpack.c.b16 %v245, %v243
  %v330 = vpack.c.b16 %v246, %v244
  %v331 = vpack.c.b16 %v249, %v247
  %v332 = vpack.c.b16 %v250, %v248
  %v333 = vpack.c.b16 %v253, %v251
  %v334 = vpack.c.b16 %v254, %v252
  %v335 = vpack.c.b16 %v257, %v255
  %v336 = vpack.c.b16 %v258, %v256
  %v337 = vpack.c.b16 %v261, %v259
  %v338 = vpack.c.b16 %v262, %v260
  %v339 = vpack.c.b16 %v265, %v263
  %v340 = vpack.c.b16 %v266, %v264
  %v341 = vpack.c.b16 %v269, %v267
  %v342 = vpack.c.b16 %v270, %v268
  %v343 = vpack.c.b16 %v273, %v271
  %v344 = vpack.c.b16 %v274, %v272
  %v345 = vpack.c.b16 %v277, %v275
  %v346 = vpack.c.b16 %v278, %v276
  %v347 = vpack.c.b16 %v281, %v279
  %v348 = vpack.c.b16 %v282, %v280
  %v349 = vpack.c.b16 %v285, %v283
  %v350 = vpack.c.b16 %v286, %v284
  %v402 = vunpack.c.l.b16 %v76
  %v403 = vunpack.c.l.b16 %v77
  %v404 = vunpack.c.l.b16 %v78
  %v405 = vunpack.c.l.b16 %v79
  %v406 = vunpack.c.l.b16 %v80
  %v407 = vunpack.c.l.b16 %v81
  %v408 = vunpack.c.l.b16 %v82
  %v409 = vunpack.c.l.b16 %v83
  %v410 = vunpack.c.l.b16 %v84
  %v411 = vunpack.c.l.b16 %v85
  %v412 = vunpack.c.l.b16 %v86
  %v413 = vunpack.c.l.b16 %v87
  %v414 = vunpack.c.l.b16 %v88
  %v415 = vunpack.c.l.b16 %v89
  %v416 = vunpack.c.l.b16 %v90
  %v417 = vunpack.c.l.b16 %v91
  %v418 = vunpack.c.l.b16 %v92
  %v419 = vunpack.c.l.b16 %v93
  %v420 = vunpack.c.l.b16 %v94
  %v421 = vpack.c.b16 %v403, %v402
  %v422 = vpack.c.b16 %v405, %v404
  %v423 = vpack.c.b16 %v407, %v406
  %v424 = vpack.c.b16 %v409, %v408
  %v425 = vpack.c.b16 %v411, %v410
  %v426 = vpack.c.b16 %v413, %v412
  %v427 = vpack.c.b16 %v415, %v414
  %v428 = vpack.c.b16 %v417, %v416
  %v429 = vpack.c.b16 %v419, %v418
  %v430 = vpack.c.b16 %v420, %v420
  %vm440 = vcmask 154624
  %v442 = vsel %vm440, %v288, 0
  %v445 = vsel %vm440, %v290, 0
  %v448 = vsel %vm440, %v292, 0
  %v451 = vsel %vm440, %v294, 0
  %v454 = vsel %vm440, %v296, 0
  %v457 = vsel %vm440, %v298, 0
  %v460 = vsel %vm440, %v300, 0
  %v463 = vsel %vm440, %v302, 0
  %v466 = vsel %vm440, %v304, 0
  %v469 = vsel %vm440, %v306, 0
  %v472 = vsel %vm440, %v308, 0
  %v475 = vsel %vm440, %v310, 0
  %v478 = vsel %vm440, %v312, 0
  %v481 = vsel %vm440, %v314, 0
  %v484 = vsel %vm440, %v316, 0
  %v487 = vsel %vm440, %v318, 0
  %v490 = vsel %vm440, %v320, 0
  %v493 = vsel %vm440, %v322, 0
  %v496 = vsel %vm440, %v324, 0
  %v499 = vsel %vm440, %v326, 0
  %v502 = vsel %vm440, %v328, 0
  %v505 = vsel %vm440, %v330, 0
  %v508 = vsel %vm440, %v332, 0
  %v511 = vsel %vm440, %v334, 0
  %v514 = vsel %vm440, %v336, 0
  %v517 = vsel %vm440, %v338, 0
  %v520 = vsel %vm440, %v340, 0
  %v523 = vsel %vm440, %v342, 0
  %v526 = vsel %vm440, %v344, 0
  %v529 = vsel %vm440, %v346, 0
  %v532 = vsel %vm440, %v348, 0
  %v535 = vsel %vm440, %v350, 0
  %vm537 = vcmask 1040384
  %vm538 = vcmask 1041408
  %v539 = vsel %vm537, 4294967295, 65535
  %v540 = vsel %vm538, %v539, 0
  %v542 = vand.u32 %v430, %v540
  %544 = vmatprep.subr.bf16.mxu0 0
  %545 = vmatpush1.bf16.msra.mxu0 %v428
  %546 = vmatprep.subr.bf16.mxu0 0
  %547 = vmatpush1.bf16.msra.mxu0 %v427
  %548 = vmatprep.subr.bf16.mxu0 0
  %549 = vmatpush1.bf16.msra.mxu0 %v426
  %550 = vmatprep.subr.bf16.mxu0 0
  %551 = vmatpush1.bf16.msra.mxu0 %v425
  %552 = vmatprep.subr.bf16.mxu0 0
  %553 = vmatpush1.bf16.msra.mxu0 %v424
  %554 = vmatprep.subr.bf16.mxu0 0
  %555 = vmatpush1.bf16.msra.mxu0 %v423
  %556 = vmatprep.subr.bf16.mxu0 0
  %557 = vmatpush1.bf16.msra.mxu0 %v422
  %558 = vmatprep.subr.bf16.mxu0 0
  %559 = vmatpush1.bf16.msra.mxu0 %v421
  %560 = vmatprep.subr.bf16.mxu0 0
  %561 = vmatpush2.bf16.msra.mxu0 0
  %562 = vmatprep.subr.bf16.mxu0 0
  %563 = vmatpush2.bf16.msra.mxu0 0
  %564 = vmatprep.subr.bf16.mxu0 0
  %565 = vmatpush2.bf16.msra.mxu0 0
  %566 = vmatprep.subr.bf16.mxu0 0
  %567 = vmatpush2.bf16.msra.mxu0 0
  %568 = vmatprep.subr.bf16.mxu0 0
  %569 = vmatpush2.bf16.msra.mxu0 0
  %570 = vmatprep.subr.bf16.mxu0 0
  %571 = vmatpush2.bf16.msra.mxu0 0
  %572 = vmatprep.subr.bf16.mxu0 0
  %573 = vmatpush2.bf16.msra.mxu0 %v542
  %574 = vmatprep.subr.bf16.mxu0 0
  %575 = vmatpush2.bf16.msra.mxu0 %v429
  %576 = vmatprep.mubr.bf16.mxu0 %v442
  %577 = vmatmul.mubr.bf16.gmra.mxu0 %v287
  %v578 = vpop.f32.mrf.mxu0
  %v579 = vadd.f32 0.0, %v578
  %v580 = vpop.f32.mrf.mxu0
  %v581 = vpop.f32.mrf.mxu0
  %v582 = vadd.f32 0.0, %v581
  %v583 = vpop.f32.mrf.mxu0
  %584 = vmatprep.mubr.bf16.mxu0 %v445
  %585 = vmatmul.mubr.bf16.gmra.mxu0 %v289
  %v586 = vpop.f32.mrf.mxu0
  %v587 = vadd.f32 0.0, %v586
  %v588 = vpop.f32.mrf.mxu0
  %v589 = vpop.f32.mrf.mxu0
  %v590 = vadd.f32 0.0, %v589
  %v591 = vpop.f32.mrf.mxu0
  %592 = vmatprep.mubr.bf16.mxu0 %v448
  %593 = vmatmul.mubr.bf16.gmra.mxu0 %v291
  %v594 = vpop.f32.mrf.mxu0
  %v595 = vadd.f32 0.0, %v594
  %v596 = vpop.f32.mrf.mxu0
  %v597 = vpop.f32.mrf.mxu0
  %v598 = vadd.f32 0.0, %v597
  %v599 = vpop.f32.mrf.mxu0
  %600 = vmatprep.mubr.bf16.mxu0 %v451
  %601 = vmatmul.mubr.bf16.gmra.mxu0 %v293
  %v602 = vpop.f32.mrf.mxu0
  %v603 = vadd.f32 0.0, %v602
  %v604 = vpop.f32.mrf.mxu0
  %v605 = vpop.f32.mrf.mxu0
  %v606 = vadd.f32 0.0, %v605
  %v607 = vpop.f32.mrf.mxu0
  %608 = vmatprep.mubr.bf16.mxu0 %v454
  %609 = vmatmul.mubr.bf16.gmra.mxu0 %v295
  %v610 = vpop.f32.mrf.mxu0
  %v611 = vadd.f32 0.0, %v610
  %v612 = vpop.f32.mrf.mxu0
  %v613 = vpop.f32.mrf.mxu0
  %v614 = vadd.f32 0.0, %v613
  %v615 = vpop.f32.mrf.mxu0
  %616 = vmatprep.mubr.bf16.mxu0 %v457
  %617 = vmatmul.mubr.bf16.gmra.mxu0 %v297
  %v618 = vpop.f32.mrf.mxu0
  %v619 = vadd.f32 0.0, %v618
  %v620 = vpop.f32.mrf.mxu0
  %v621 = vpop.f32.mrf.mxu0
  %v622 = vadd.f32 0.0, %v621
  %v623 = vpop.f32.mrf.mxu0
  %624 = vmatprep.mubr.bf16.mxu0 %v460
  %625 = vmatmul.mubr.bf16.gmra.mxu0 %v299
  %v626 = vpop.f32.mrf.mxu0
  %v627 = vadd.f32 0.0, %v626
  %v628 = vpop.f32.mrf.mxu0
  %v629 = vpop.f32.mrf.mxu0
  %v630 = vadd.f32 0.0, %v629
  %v631 = vpop.f32.mrf.mxu0
  %632 = vmatprep.mubr.bf16.mxu0 %v463
  %633 = vmatmul.mubr.bf16.gmra.mxu0 %v301
  %v634 = vpop.f32.mrf.mxu0
  %v635 = vadd.f32 0.0, %v634
  %v636 = vpop.f32.mrf.mxu0
  %v637 = vpop.f32.mrf.mxu0
  %v638 = vadd.f32 0.0, %v637
  %v639 = vpop.f32.mrf.mxu0
  %640 = vmatprep.mubr.bf16.mxu0 %v466
  %641 = vmatmul.mubr.bf16.gmra.mxu0 %v303
  %v642 = vpop.f32.mrf.mxu0
  %v643 = vadd.f32 0.0, %v642
  %v644 = vpop.f32.mrf.mxu0
  %v645 = vpop.f32.mrf.mxu0
  %v646 = vadd.f32 0.0, %v645
  %v647 = vpop.f32.mrf.mxu0
  %648 = vmatprep.mubr.bf16.mxu0 %v469
  %649 = vmatmul.mubr.bf16.gmra.mxu0 %v305
  %v650 = vpop.f32.mrf.mxu0
  %v651 = vadd.f32 0.0, %v650
  %v652 = vpop.f32.mrf.mxu0
  %v653 = vpop.f32.mrf.mxu0
  %v654 = vadd.f32 0.0, %v653
  %v655 = vpop.f32.mrf.mxu0
  %656 = vmatprep.mubr.bf16.mxu0 %v472
  %657 = vmatmul.mubr.bf16.gmra.mxu0 %v307
  %v658 = vpop.f32.mrf.mxu0
  %v659 = vadd.f32 0.0, %v658
  %v660 = vpop.f32.mrf.mxu0
  %v661 = vpop.f32.mrf.mxu0
  %v662 = vadd.f32 0.0, %v661
  %v663 = vpop.f32.mrf.mxu0
  %664 = vmatprep.mubr.bf16.mxu0 %v475
  %665 = vmatmul.mubr.bf16.gmra.mxu0 %v309
  %v666 = vpop.f32.mrf.mxu0
  %v667 = vadd.f32 0.0, %v666
  %v668 = vpop.f32.mrf.mxu0
  %v669 = vpop.f32.mrf.mxu0
  %v670 = vadd.f32 0.0, %v669
  %v671 = vpop.f32.mrf.mxu0
  %672 = vmatprep.mubr.bf16.mxu0 %v478
  %673 = vmatmul.mubr.bf16.gmra.mxu0 %v311
  %v674 = vpop.f32.mrf.mxu0
  %v675 = vadd.f32 0.0, %v674
  %v676 = vpop.f32.mrf.mxu0
  %v677 = vpop.f32.mrf.mxu0
  %v678 = vadd.f32 0.0, %v677
  %v679 = vpop.f32.mrf.mxu0
  %680 = vmatprep.mubr.bf16.mxu0 %v481
  %681 = vmatmul.mubr.bf16.gmra.mxu0 %v313
  %v682 = vpop.f32.mrf.mxu0
  %v683 = vadd.f32 0.0, %v682
  %v684 = vpop.f32.mrf.mxu0
  %v685 = vpop.f32.mrf.mxu0
  %v686 = vadd.f32 0.0, %v685
  %v687 = vpop.f32.mrf.mxu0
  %688 = vmatprep.mubr.bf16.mxu0 %v484
  %689 = vmatmul.mubr.bf16.gmra.mxu0 %v315
  %v690 = vpop.f32.mrf.mxu0
  %v691 = vadd.f32 0.0, %v690
  %v692 = vpop.f32.mrf.mxu0
  %v693 = vpop.f32.mrf.mxu0
  %v694 = vadd.f32 0.0, %v693
  %v695 = vpop.f32.mrf.mxu0
  %696 = vmatprep.mubr.bf16.mxu0 %v487
  %697 = vmatmul.mubr.bf16.gmra.mxu0 %v317
  %v698 = vpop.f32.mrf.mxu0
  %v699 = vadd.f32 0.0, %v698
  %v700 = vpop.f32.mrf.mxu0
  %v701 = vpop.f32.mrf.mxu0
  %v702 = vadd.f32 0.0, %v701
  %v703 = vpop.f32.mrf.mxu0
  %704 = vmatprep.mubr.bf16.mxu0 %v490
  %705 = vmatmul.mubr.bf16.gmra.mxu0 %v319
  %v706 = vpop.f32.mrf.mxu0
  %v707 = vadd.f32 0.0, %v706
  %v708 = vpop.f32.mrf.mxu0
  %v709 = vpop.f32.mrf.mxu0
  %v710 = vadd.f32 0.0, %v709
  %v711 = vpop.f32.mrf.mxu0
  %712 = vmatprep.mubr.bf16.mxu0 %v493
  %713 = vmatmul.mubr.bf16.gmra.mxu0 %v321
  %v714 = vpop.f32.mrf.mxu0
  %v715 = vadd.f32 0.0, %v714
  %v716 = vpop.f32.mrf.mxu0
  %v717 = vpop.f32.mrf.mxu0
  %v718 = vadd.f32 0.0, %v717
  %v719 = vpop.f32.mrf.mxu0
  %720 = vmatprep.mubr.bf16.mxu0 %v496
  %721 = vmatmul.mubr.bf16.gmra.mxu0 %v323
  %v722 = vpop.f32.mrf.mxu0
  %v723 = vadd.f32 0.0, %v722
  %v724 = vpop.f32.mrf.mxu0
  %v725 = vpop.f32.mrf.mxu0
  %v726 = vadd.f32 0.0, %v725
  %v727 = vpop.f32.mrf.mxu0
  %728 = vmatprep.mubr.bf16.mxu0 %v499
  %729 = vmatmul.mubr.bf16.gmra.mxu0 %v325
  %v730 = vpop.f32.mrf.mxu0
  %v731 = vadd.f32 0.0, %v730
  %v732 = vpop.f32.mrf.mxu0
  %v733 = vpop.f32.mrf.mxu0
  %v734 = vadd.f32 0.0, %v733
  %v735 = vpop.f32.mrf.mxu0
  %736 = vmatprep.mubr.bf16.mxu0 %v502
  %737 = vmatmul.mubr.bf16.gmra.mxu0 %v327
  %v738 = vpop.f32.mrf.mxu0
  %v739 = vadd.f32 0.0, %v738
  %v740 = vpop.f32.mrf.mxu0
  %v741 = vpop.f32.mrf.mxu0
  %v742 = vadd.f32 0.0, %v741
  %v743 = vpop.f32.mrf.mxu0
  %744 = vmatprep.mubr.bf16.mxu0 %v505
  %745 = vmatmul.mubr.bf16.gmra.mxu0 %v329
  %v746 = vpop.f32.mrf.mxu0
  %v747 = vadd.f32 0.0, %v746
  %v748 = vpop.f32.mrf.mxu0
  %v749 = vpop.f32.mrf.mxu0
  %v750 = vadd.f32 0.0, %v749
  %v751 = vpop.f32.mrf.mxu0
  %752 = vmatprep.mubr.bf16.mxu0 %v508
  %753 = vmatmul.mubr.bf16.gmra.mxu0 %v331
  %v754 = vpop.f32.mrf.mxu0
  %v755 = vadd.f32 0.0, %v754
  %v756 = vpop.f32.mrf.mxu0
  %v757 = vpop.f32.mrf.mxu0
  %v758 = vadd.f32 0.0, %v757
  %v759 = vpop.f32.mrf.mxu0
  %760 = vmatprep.mubr.bf16.mxu0 %v511
  %761 = vmatmul.mubr.bf16.gmra.mxu0 %v333
  %v762 = vpop.f32.mrf.mxu0
  %v763 = vadd.f32 0.0, %v762
  %v764 = vpop.f32.mrf.mxu0
  %v765 = vpop.f32.mrf.mxu0
  %v766 = vadd.f32 0.0, %v765
  %v767 = vpop.f32.mrf.mxu0
  %768 = vmatprep.mubr.bf16.mxu0 %v514
  %769 = vmatmul.mubr.bf16.gmra.mxu0 %v335
  %v770 = vpop.f32.mrf.mxu0
  %v771 = vadd.f32 0.0, %v770
  %v772 = vpop.f32.mrf.mxu0
  %v773 = vpop.f32.mrf.mxu0
  %v774 = vadd.f32 0.0, %v773
  %v775 = vpop.f32.mrf.mxu0
  %776 = vmatprep.mubr.bf16.mxu0 %v517
  %777 = vmatmul.mubr.bf16.gmra.mxu0 %v337
  %v778 = vpop.f32.mrf.mxu0
  %v779 = vadd.f32 0.0, %v778
  %v780 = vpop.f32.mrf.mxu0
  %v781 = vpop.f32.mrf.mxu0
  %v782 = vadd.f32 0.0, %v781
  %v783 = vpop.f32.mrf.mxu0
  %784 = vmatprep.mubr.bf16.mxu0 %v520
  %785 = vmatmul.mubr.bf16.gmra.mxu0 %v339
  %v786 = vpop.f32.mrf.mxu0
  %v787 = vadd.f32 0.0, %v786
  %v788 = vpop.f32.mrf.mxu0
  %v789 = vpop.f32.mrf.mxu0
  %v790 = vadd.f32 0.0, %v789
  %v791 = vpop.f32.mrf.mxu0
  %792 = vmatprep.mubr.bf16.mxu0 %v523
  %793 = vmatmul.mubr.bf16.gmra.mxu0 %v341
  %v794 = vpop.f32.mrf.mxu0
  %v795 = vadd.f32 0.0, %v794
  %v796 = vpop.f32.mrf.mxu0
  %v797 = vpop.f32.mrf.mxu0
  %v798 = vadd.f32 0.0, %v797
  %v799 = vpop.f32.mrf.mxu0
  %800 = vmatprep.mubr.bf16.mxu0 %v526
  %801 = vmatmul.mubr.bf16.gmra.mxu0 %v343
  %v802 = vpop.f32.mrf.mxu0
  %v803 = vadd.f32 0.0, %v802
  %v804 = vpop.f32.mrf.mxu0
  %v805 = vpop.f32.mrf.mxu0
  %v806 = vadd.f32 0.0, %v805
  %v807 = vpop.f32.mrf.mxu0
  %808 = vmatprep.mubr.bf16.mxu0 %v529
  %809 = vmatmul.mubr.bf16.gmra.mxu0 %v345
  %v810 = vpop.f32.mrf.mxu0
  %v811 = vadd.f32 0.0, %v810
  %v812 = vpop.f32.mrf.mxu0
  %v813 = vpop.f32.mrf.mxu0
  %v814 = vadd.f32 0.0, %v813
  %v815 = vpop.f32.mrf.mxu0
  %816 = vmatprep.mubr.bf16.mxu0 %v532
  %817 = vmatmul.mubr.bf16.gmra.mxu0 %v347
  %v818 = vpop.f32.mrf.mxu0
  %v819 = vadd.f32 0.0, %v818
  %v820 = vpop.f32.mrf.mxu0
  %v821 = vpop.f32.mrf.mxu0
  %v822 = vadd.f32 0.0, %v821
  %v823 = vpop.f32.mrf.mxu0
  %824 = vmatprep.mubr.bf16.mxu0 %v535
  %825 = vmatmul.mubr.bf16.gmra.mxu0 %v349
  %v826 = vpop.f32.mrf.mxu0
  %v827 = vadd.f32 0.0, %v826
  %v828 = vpop.f32.mrf.mxu0
  %v829 = vpop.f32.mrf.mxu0
  %v830 = vadd.f32 0.0, %v829
  %v831 = vpop.f32.mrf.mxu0
  %832 = vdwg.mxu0
  %v833 = vpack.c.bf16 %v582, %v579
  %v834 = vpack.c.bf16 %v590, %v587
  %v835 = vpack.c.bf16 %v598, %v595
  %v836 = vpack.c.bf16 %v606, %v603
  %v837 = vpack.c.bf16 %v614, %v611
  %v838 = vpack.c.bf16 %v622, %v619
  %v839 = vpack.c.bf16 %v630, %v627
  %v840 = vpack.c.bf16 %v638, %v635
  %v841 = vpack.c.bf16 %v646, %v643
  %v842 = vpack.c.bf16 %v654, %v651
  %v843 = vpack.c.bf16 %v662, %v659
  %v844 = vpack.c.bf16 %v670, %v667
  %v845 = vpack.c.bf16 %v678, %v675
  %v846 = vpack.c.bf16 %v686, %v683
  %v847 = vpack.c.bf16 %v694, %v691
  %v848 = vpack.c.bf16 %v702, %v699
  %v849 = vpack.c.bf16 %v710, %v707
  %v850 = vpack.c.bf16 %v718, %v715
  %v851 = vpack.c.bf16 %v726, %v723
  %v852 = vpack.c.bf16 %v734, %v731
  %v853 = vpack.c.bf16 %v742, %v739
  %v854 = vpack.c.bf16 %v750, %v747
  %v855 = vpack.c.bf16 %v758, %v755
  %v856 = vpack.c.bf16 %v766, %v763
  %v857 = vpack.c.bf16 %v774, %v771
  %v858 = vpack.c.bf16 %v782, %v779
  %v859 = vpack.c.bf16 %v790, %v787
  %v860 = vpack.c.bf16 %v798, %v795
  %v861 = vpack.c.bf16 %v806, %v803
  %v862 = vpack.c.bf16 %v814, %v811
  %v863 = vpack.c.bf16 %v822, %v819
  %v864 = vpack.c.bf16 %v830, %v827
  %v897 = vunpack.c.l.b16 %v833
  %v898 = vunpack.c.h.b16 %v833
  %v899 = vunpack.c.l.b16 %v834
  %v900 = vunpack.c.h.b16 %v834
  %v901 = vunpack.c.l.b16 %v835
  %v902 = vunpack.c.h.b16 %v835
  %v903 = vunpack.c.l.b16 %v836
  %v904 = vunpack.c.h.b16 %v836
  %v905 = vunpack.c.l.b16 %v837
  %v906 = vunpack.c.h.b16 %v837
  %v907 = vunpack.c.l.b16 %v838
  %v908 = vunpack.c.h.b16 %v838
  %v909 = vunpack.c.l.b16 %v839
  %v910 = vunpack.c.h.b16 %v839
  %v911 = vunpack.c.l.b16 %v840
  %v912 = vunpack.c.h.b16 %v840
  %v913 = vunpack.c.l.b16 %v841
  %v914 = vunpack.c.h.b16 %v841
  %v915 = vunpack.c.l.b16 %v842
  %v916 = vunpack.c.h.b16 %v842
  %v917 = vunpack.c.l.b16 %v843
  %v918 = vunpack.c.h.b16 %v843
  %v919 = vunpack.c.l.b16 %v844
  %v920 = vunpack.c.h.b16 %v844
  %v921 = vunpack.c.l.b16 %v845
  %v922 = vunpack.c.h.b16 %v845
  %v923 = vunpack.c.l.b16 %v846
  %v924 = vunpack.c.h.b16 %v846
  %v925 = vunpack.c.l.b16 %v847
  %v926 = vunpack.c.h.b16 %v847
  %v927 = vunpack.c.l.b16 %v848
  %v928 = vunpack.c.h.b16 %v848
  %v929 = vunpack.c.l.b16 %v849
  %v930 = vunpack.c.h.b16 %v849
  %v931 = vunpack.c.l.b16 %v850
  %v932 = vunpack.c.h.b16 %v850
  %v933 = vunpack.c.l.b16 %v851
  %v934 = vunpack.c.h.b16 %v851
  %v935 = vunpack.c.l.b16 %v852
  %v936 = vunpack.c.h.b16 %v852
  %v937 = vunpack.c.l.b16 %v853
  %v938 = vunpack.c.h.b16 %v853
  %v939 = vunpack.c.l.b16 %v854
  %v940 = vunpack.c.h.b16 %v854
  %v941 = vunpack.c.l.b16 %v855
  %v942 = vunpack.c.h.b16 %v855
  %v943 = vunpack.c.l.b16 %v856
  %v944 = vunpack.c.h.b16 %v856
  %v945 = vunpack.c.l.b16 %v857
  %v946 = vunpack.c.h.b16 %v857
  %v947 = vunpack.c.l.b16 %v858
  %v948 = vunpack.c.h.b16 %v858
  %v949 = vunpack.c.l.b16 %v859
  %v950 = vunpack.c.h.b16 %v859
  %v951 = vunpack.c.l.b16 %v860
  %v952 = vunpack.c.h.b16 %v860
  %v953 = vunpack.c.l.b16 %v861
  %v954 = vunpack.c.h.b16 %v861
  %v955 = vunpack.c.l.b16 %v862
  %v956 = vunpack.c.h.b16 %v862
  %v957 = vunpack.c.l.b16 %v863
  %v958 = vunpack.c.h.b16 %v863
  %v959 = vunpack.c.l.b16 %v864
  %v960 = vunpack.c.h.b16 %v864
  %v961 = vpack.c.b16 %v897, %v897
  %v962 = vpack.c.b16 %v898, %v898
  %v963 = vpack.c.b16 %v899, %v899
  %v964 = vpack.c.b16 %v900, %v900
  %v965 = vpack.c.b16 %v901, %v901
  %v966 = vpack.c.b16 %v902, %v902
  %v967 = vpack.c.b16 %v903, %v903
  %v968 = vpack.c.b16 %v904, %v904
  %v969 = vpack.c.b16 %v905, %v905
  %v970 = vpack.c.b16 %v906, %v906
  %v971 = vpack.c.b16 %v907, %v907
  %v972 = vpack.c.b16 %v908, %v908
  %v973 = vpack.c.b16 %v909, %v909
  %v974 = vpack.c.b16 %v910, %v910
  %v975 = vpack.c.b16 %v911, %v911
  %v976 = vpack.c.b16 %v912, %v912
  %v977 = vpack.c.b16 %v913, %v913
  %v978 = vpack.c.b16 %v914, %v914
  %v979 = vpack.c.b16 %v915, %v915
  %v980 = vpack.c.b16 %v916, %v916
  %v981 = vpack.c.b16 %v917, %v917
  %v982 = vpack.c.b16 %v918, %v918
  %v983 = vpack.c.b16 %v919, %v919
  %v984 = vpack.c.b16 %v920, %v920
  %v985 = vpack.c.b16 %v921, %v921
  %v986 = vpack.c.b16 %v922, %v922
  %v987 = vpack.c.b16 %v923, %v923
  %v988 = vpack.c.b16 %v924, %v924
  %v989 = vpack.c.b16 %v925, %v925
  %v990 = vpack.c.b16 %v926, %v926
  %v991 = vpack.c.b16 %v927, %v927
  %v992 = vpack.c.b16 %v928, %v928
  %v993 = vpack.c.b16 %v929, %v929
  %v994 = vpack.c.b16 %v930, %v930
  %v995 = vpack.c.b16 %v931, %v931
  %v996 = vpack.c.b16 %v932, %v932
  %v997 = vpack.c.b16 %v933, %v933
  %v998 = vpack.c.b16 %v934, %v934
  %v999 = vpack.c.b16 %v935, %v935
  %v1000 = vpack.c.b16 %v936, %v936
  %v1001 = vpack.c.b16 %v937, %v937
  %v1002 = vpack.c.b16 %v938, %v938
  %v1003 = vpack.c.b16 %v939, %v939
  %v1004 = vpack.c.b16 %v940, %v940
  %v1005 = vpack.c.b16 %v941, %v941
  %v1006 = vpack.c.b16 %v942, %v942
  %v1007 = vpack.c.b16 %v943, %v943
  %v1008 = vpack.c.b16 %v944, %v944
  %v1009 = vpack.c.b16 %v945, %v945
  %v1010 = vpack.c.b16 %v946, %v946
  %v1011 = vpack.c.b16 %v947, %v947
  %v1012 = vpack.c.b16 %v948, %v948
  %v1013 = vpack.c.b16 %v949, %v949
  %v1014 = vpack.c.b16 %v950, %v950
  %v1015 = vpack.c.b16 %v951, %v951
  %v1016 = vpack.c.b16 %v952, %v952
  %v1017 = vpack.c.b16 %v953, %v953
  %v1018 = vpack.c.b16 %v954, %v954
  %v1019 = vpack.c.b16 %v955, %v955
  %v1020 = vpack.c.b16 %v956, %v956
  %v1021 = vpack.c.b16 %v957, %v957
  %v1022 = vpack.c.b16 %v958, %v958
  %v1023 = vpack.c.b16 %v959, %v959
  %v1024 = vpack.c.b16 %v960, %v960
  %vm1089 = vcmask 519168
  %1090 = vst.msk [vmem:[%s2] sm:$0xf] %vm1089, %v961
  %1091 = vst.msk [vmem:[%s2 + $0x4] sm:$0xf] %vm1089, %v962
  %1092 = vst.msk [vmem:[%s2 + $0x8] sm:$0xf] %vm1089, %v963
  %1093 = vst.msk [vmem:[%s2 + $0xc] sm:$0xf] %vm1089, %v964
  %1094 = vst.msk [vmem:[%s2 + $0x10] sm:$0xf] %vm1089, %v965
  %1095 = vst.msk [vmem:[%s2 + $0x14] sm:$0xf] %vm1089, %v966
  %1096 = vst.msk [vmem:[%s2 + $0x18] sm:$0xf] %vm1089, %v967
  %1097 = vst.msk [vmem:[%s2 + $0x1c] sm:$0xf] %vm1089, %v968
  %1098 = vst.msk [vmem:[%s2 + $0x20] sm:$0xf] %vm1089, %v969
  %1099 = vst.msk [vmem:[%s2 + $0x24] sm:$0xf] %vm1089, %v970
  %1100 = vst.msk [vmem:[%s2 + $0x28] sm:$0xf] %vm1089, %v971
  %1101 = vst.msk [vmem:[%s2 + $0x2c] sm:$0xf] %vm1089, %v972
  %1102 = vst.msk [vmem:[%s2 + $0x30] sm:$0xf] %vm1089, %v973
  %1103 = vst.msk [vmem:[%s2 + $0x34] sm:$0xf] %vm1089, %v974
  %1104 = vst.msk [vmem:[%s2 + $0x38] sm:$0xf] %vm1089, %v975
  %1105 = vst.msk [vmem:[%s2 + $0x3c] sm:$0xf] %vm1089, %v976
  %1106 = vst.msk [vmem:[%s2 + $0x40] sm:$0xf] %vm1089, %v977
  %1107 = vst.msk [vmem:[%s2 + $0x44] sm:$0xf] %vm1089, %v978
  %1108 = vst.msk [vmem:[%s2 + $0x48] sm:$0xf] %vm1089, %v979
  %1109 = vst.msk [vmem:[%s2 + $0x4c] sm:$0xf] %vm1089, %v980
  %1110 = vst.msk [vmem:[%s2 + $0x50] sm:$0xf] %vm1089, %v981
  %1111 = vst.msk [vmem:[%s2 + $0x54] sm:$0xf] %vm1089, %v982
  %1112 = vst.msk [vmem:[%s2 + $0x58] sm:$0xf] %vm1089, %v983
  %1113 = vst.msk [vmem:[%s2 + $0x5c] sm:$0xf] %vm1089, %v984
  %1114 = vst.msk [vmem:[%s2 + $0x60] sm:$0xf] %vm1089, %v985
  %1115 = vst.msk [vmem:[%s2 + $0x64] sm:$0xf] %vm1089, %v986
  %1116 = vst.msk [vmem:[%s2 + $0x68] sm:$0xf] %vm1089, %v987
  %1117 = vst.msk [vmem:[%s2 + $0x6c] sm:$0xf] %vm1089, %v988
  %1118 = vst.msk [vmem:[%s2 + $0x70] sm:$0xf] %vm1089, %v989
  %1119 = vst.msk [vmem:[%s2 + $0x74] sm:$0xf] %vm1089, %v990
  %1120 = vst.msk [vmem:[%s2 + $0x78] sm:$0xf] %vm1089, %v991
  %1121 = vst.msk [vmem:[%s2 + $0x7c] sm:$0xf] %vm1089, %v992
  %1122 = vst.msk [vmem:[%s2 + $0x80] sm:$0xf] %vm1089, %v993
  %1123 = vst.msk [vmem:[%s2 + $0x84] sm:$0xf] %vm1089, %v994
  %1124 = vst.msk [vmem:[%s2 + $0x88] sm:$0xf] %vm1089, %v995
  %1125 = vst.msk [vmem:[%s2 + $0x8c] sm:$0xf] %vm1089, %v996
  %1126 = vst.msk [vmem:[%s2 + $0x90] sm:$0xf] %vm1089, %v997
  %1127 = vst.msk [vmem:[%s2 + $0x94] sm:$0xf] %vm1089, %v998
  %1128 = vst.msk [vmem:[%s2 + $0x98] sm:$0xf] %vm1089, %v999
  %1129 = vst.msk [vmem:[%s2 + $0x9c] sm:$0xf] %vm1089, %v1000
  %1130 = vst.msk [vmem:[%s2 + $0xa0] sm:$0xf] %vm1089, %v1001
  %1131 = vst.msk [vmem:[%s2 + $0xa4] sm:$0xf] %vm1089, %v1002
  %1132 = vst.msk [vmem:[%s2 + $0xa8] sm:$0xf] %vm1089, %v1003
  %1133 = vst.msk [vmem:[%s2 + $0xac] sm:$0xf] %vm1089, %v1004
  %1134 = vst.msk [vmem:[%s2 + $0xb0] sm:$0xf] %vm1089, %v1005
  %1135 = vst.msk [vmem:[%s2 + $0xb4] sm:$0xf] %vm1089, %v1006
  %1136 = vst.msk [vmem:[%s2 + $0xb8] sm:$0xf] %vm1089, %v1007
  %1137 = vst.msk [vmem:[%s2 + $0xbc] sm:$0xf] %vm1089, %v1008
  %1138 = vst.msk [vmem:[%s2 + $0xc0] sm:$0xf] %vm1089, %v1009
  %1139 = vst.msk [vmem:[%s2 + $0xc4] sm:$0xf] %vm1089, %v1010
  %1140 = vst.msk [vmem:[%s2 + $0xc8] sm:$0xf] %vm1089, %v1011
  %1141 = vst.msk [vmem:[%s2 + $0xcc] sm:$0xf] %vm1089, %v1012
  %1142 = vst.msk [vmem:[%s2 + $0xd0] sm:$0xf] %vm1089, %v1013
  %1143 = vst.msk [vmem:[%s2 + $0xd4] sm:$0xf] %vm1089, %v1014
  %1144 = vst.msk [vmem:[%s2 + $0xd8] sm:$0xf] %vm1089, %v1015
  %1145 = vst.msk [vmem:[%s2 + $0xdc] sm:$0xf] %vm1089, %v1016
  %1146 = vst.msk [vmem:[%s2 + $0xe0] sm:$0xf] %vm1089, %v1017
  %1147 = vst.msk [vmem:[%s2 + $0xe4] sm:$0xf] %vm1089, %v1018
  %1148 = vst.msk [vmem:[%s2 + $0xe8] sm:$0xf] %vm1089, %v1019
  %1149 = vst.msk [vmem:[%s2 + $0xec] sm:$0xf] %vm1089, %v1020
  %1150 = vst.msk [vmem:[%s2 + $0xf0] sm:$0xf] %vm1089, %v1021
  %1151 = vst.msk [vmem:[%s2 + $0xf4] sm:$0xf] %vm1089, %v1022
  %1152 = vst.msk [vmem:[%s2 + $0xf8] sm:$0xf] %vm1089, %v1023
  %1153 = vst.msk [vmem:[%s2 + $0xfc] sm:$0xf] %vm1089, %v1024
  // Predicated region
  $region10: #{_pallas_matmul.1} parent=0 // pred_check
    _
  $region11: #{_pallas_matmul.1} parent=0 // pred_check_branch
    %1155 = sbr.rel (0) target = $region13
  $region12: #{_pallas_matmul.1} parent=0 // pred_region
    _
  $region13: #{_pallas_matmul.1} parent=0 // pred_fallthru
    _
  // Predicated region
  $region14: #{_pallas_matmul.1} parent=0 // pred_check
    _
  $region15: #{_pallas_matmul.1} parent=0 // pred_check_branch
    %1157 = sbr.rel (0) target = $region17
  $region16: #{_pallas_matmul.1} parent=0 // pred_region
    _
  $region17: #{_pallas_matmul.1} parent=0 // pred_fallthru
    _

</llo_original>
